<compile_context>
chip_gen: v7x
topology: tpu7x:2x2x1
jax: 0.10.0
libtpu: 0.0.40
codegen_flags: <defaults>
</compile_context>

<pallas_src>
import jax
import jax.numpy as jnp
import numpy as np
from jax.experimental import pallas as pl
from jax.experimental.pallas import tpu as pltpu


def _round_up(n, m):
    return ((n + m - 1) // m) * m


def _chip_info():
    """Returns (num_tensorcores_per_chip, vmem_capacity_bytes, has_256wide_mxu)."""
    try:
        kind = jax.devices()[0].device_kind.lower()
    except Exception:
        kind = ""
    is_v7 = "v7" in kind
    is_v5 = "v5" in kind
    try:
        vmem_cap = int(pltpu.get_tpu_info().vmem_capacity_bytes)
    except Exception:
        vmem_cap = (64 << 20) if is_v7 else (128 << 20)
    num_tcs = 2 if is_v7 else 1      # v5e/v6e have a single TensorCore per chip
    mxu_256 = not is_v5              # v6e/v7x MXUs are 2x256x256; v5e is 128-wide
    return num_tcs, vmem_cap, mxu_256


def _wrapper_kernel(x_ref, w_ref, b_ref, o_ref):
    # logits = x @ W + b   (bf16 operands on the MXU, f32 accumulation)
    logits = jnp.dot(x_ref[...], w_ref[...], preferred_element_type=jnp.float32)
    logits = logits + b_ref[...]                      # (bt, Cp) + (1, Cp), f32

    # Numerically-stable softmax over the last (lane) axis, all in f32.
    m = jnp.max(logits, axis=-1, keepdims=True)
    e = jnp.exp(logits - m)
    denom = jnp.sum(e, axis=-1, keepdims=True)
    inv = pl.reciprocal(denom, approx=True)           # EUP slot, ~free
    inv = inv * (2.0 - denom * inv)                   # one Newton step -> ~f32 exact
    o_ref[...] = (e * inv).astype(o_ref.dtype)


def _build_call(bt, H, C_pad, B_pad, grid_steps, out_dtype, vmem_limit, cost,
                single_buffer_params):
    if single_buffer_params:
        # W / bias have constant index_maps -> one DMA total; a single VMEM
        # buffer each halves their footprint vs. default double-buffering.
        w_spec = pl.BlockSpec((H, C_pad), lambda i: (0, 0),
                              pipeline_mode=pl.Buffered(1))
        b_spec = pl.BlockSpec((1, C_pad), lambda i: (0, 0),
                              pipeline_mode=pl.Buffered(1))
    else:
        w_spec = pl.BlockSpec((H, C_pad), lambda i: (0, 0))
        b_spec = pl.BlockSpec((1, C_pad), lambda i: (0, 0))

    return pl.pallas_call(
        _wrapper_kernel,
        out_shape=jax.ShapeDtypeStruct((B_pad, C_pad), out_dtype),
        grid_spec=pltpu.PrefetchScalarGridSpec(
            num_scalar_prefetch=0,
            grid=(grid_steps,),
            in_specs=[
                pl.BlockSpec((bt, H), lambda i: (i, 0)),   # x batch tile (streamed)
                w_spec,                                     # W (resident)
                b_spec,                                     # bias (resident, f32)
            ],
            out_specs=pl.BlockSpec((bt, C_pad), lambda i: (i, 0)),
        ),
        compiler_params=pltpu.CompilerParams(
            dimension_semantics=("parallel",),
            vmem_limit_bytes=vmem_limit,
        ),
        cost_estimate=cost,
    )


def simple_model_wrapper(x, w, b, *, batch_tile=256, out_dtype=jnp.float32):
    """probs = softmax(x @ w + b, axis=-1), fused into one Pallas kernel.

    Pass out_dtype=jnp.bfloat16 to halve output HBM writeback on mem-bound
    shapes; default f32 keeps probabilities at full accumulation precision.
    """
    B, H = x.shape
    Hw, C = w.shape
    assert H == Hw, (H, Hw)

    LANE = 128
    SUBLANE = 16  # bf16 packs 16 rows per vreg

    num_tcs, vmem_cap, mxu_256 = _chip_info()

    # Lane-dense class axis.  Round to 256 on v6e/v7x when C already exceeds a
    # lane (full MXU column occupancy); 128 otherwise / on v5e.
    n_mult = 256 if (mxu_256 and C > LANE) else LANE
    C_pad = _round_up(max(C, LANE), n_mult)

    # Batch tiling.  Sanitize any user-supplied tile to a sublane multiple, and
    # only split into >=2 grid steps when the chip has 2 TensorCores (v7x) AND
    # each core would get real rows; on single-TC v5e/v6e the grid is a serial
    # loop, so a padding-only extra step would just double the work.
    batch_tile = _round_up(max(int(batch_tile), SUBLANE), SUBLANE)
    want_split = (num_tcs >= 2) and (B >= 2 * SUBLANE)
    if want_split:
        bt = min(batch_tile, _round_up(pl.cdiv(B, num_tcs), SUBLANE))
    else:
        bt = min(batch_tile, _round_up(B, SUBLANE))
    B_pad = _round_up(B, bt)
    grid_steps = B_pad // bt

    # Wrapper-side layout plumbing: bf16 MXU operands, pad only when needed.
    x_b = x.astype(jnp.bfloat16)
    x_p = x_b if B_pad == B else jnp.pad(x_b, ((0, B_pad - B), (0, 0)))
    w_b = w.astype(jnp.bfloat16)
    w_p = w_b if C_pad == C else jnp.pad(w_b, ((0, 0), (0, C_pad - C)))
    # Padded classes get a huge negative bias -> exp() == 0 -> probability 0.
    # The bias path stays f32 so -1e30 - m never overflows / NaNs.
    b_f = b.astype(jnp.float32).reshape(1, C)
    b_p = b_f if C_pad == C else jnp.pad(b_f, ((0, 0), (0, C_pad - C)),
                                         constant_values=-1e30)

    out_bytes = jnp.dtype(out_dtype).itemsize
    # Honest VMEM budget: x/out tiles double-buffered, W/bias single-buffered,
    # plus slack for Mosaic internal scratch; capped chip-aware with headroom.
    vmem_bytes = (2 * (bt * H * 2 + bt * C_pad * out_bytes)
                  + H * C_pad * 2 + C_pad * 4 + (2 << 20))
    vmem_limit = int(min(max(vmem_bytes, 16 << 20), vmem_cap - (16 << 20)))

    cost = pl.CostEstimate(
        flops=2 * B_pad * H * C_pad + 5 * B_pad * C_pad,
        transcendentals=B_pad * C_pad + B_pad,
        bytes_accessed=(B_pad * H * 2 + H * C_pad * 2 + C_pad * 4
                        + B_pad * C_pad * out_bytes),
    )

    try:
        call = _build_call(bt, H, C_pad, B_pad, grid_steps, out_dtype,
                           vmem_limit, cost, single_buffer_params=True)
        probs_pad = call(x_p, w_p, b_p)
    except Exception:
        # Fallback: default double-buffered resident W/bias (always lowers).
        call = _build_call(bt, H, C_pad, B_pad, grid_steps, out_dtype,
                           vmem_limit, cost, single_buffer_params=False)
        probs_pad = call(x_p, w_p, b_p)

    # Slice away batch/class padding.
    return probs_pad[:B, :C]


if __name__ == "__main__":
    # SimpleModelWrapper forward: probs = softmax(model(x), dim=-1).
    # Small shapes consistent with the forward: batch=8, hidden=32, classes=16.
    B, H, C = 8, 32, 16

    key = jax.random.PRNGKey(0)
    kx, kw, kb = jax.random.split(key, 3)
    x = jax.random.normal(kx, (B, H), dtype=jnp.float32)
    # Deterministic synthetic parameters of the wrapped linear model.
    w = jax.random.normal(kw, (H, C), dtype=jnp.float32) * 0.1
    b = jax.random.normal(kb, (C,), dtype=jnp.float32) * 0.1

    probs = jax.block_until_ready(simple_model_wrapper(x, w, b))

    # Pure-JAX f32 reference (kernel uses bf16 MXU operands, so tolerances are
    # loosened to the ~1e-2 level accordingly).
    ref = jax.nn.softmax(x @ w + b, axis=-1)
    np.testing.assert_allclose(np.asarray(probs), np.asarray(ref),
                               rtol=2e-2, atol=2e-2)
    assert probs.shape == (B, C)
    np.testing.assert_allclose(np.asarray(probs).sum(-1), np.ones(B),
                               rtol=0, atol=2e-3)

    print("KERNEL_OK")
</pallas_src>

<mosaic_0001>
module attributes {stable_mosaic.version = 11 : i64} {
  func.func @_wrapper_kernel(%arg0: i32, %arg1: memref<16x32xbf16, #tpu.memory_space<vmem>>, %arg2: memref<32x128xbf16, #tpu.memory_space<vmem>>, %arg3: memref<1x128xf32, #tpu.memory_space<vmem>>, %arg4: memref<16x128xf32, #tpu.memory_space<vmem>>) attributes {dimension_semantics = [#tpu.dimension_semantics<parallel>], iteration_bounds = array<i64: 1>, scalar_prefetch = 0 : i64, scratch_operands = 0 : i64, tpu.core_type = #tpu.core_type<tc>, window_params = [{transform_indices = @transform_0, window_bounds = array<i64: 16, 32>}, {pipeline_mode = #tpu.pipeline_mode<synchronous>, transform_indices = @transform_1, window_bounds = array<i64: 32, 128>}, {pipeline_mode = #tpu.pipeline_mode<synchronous>, transform_indices = @transform_2, window_bounds = array<i64: 1, 128>}, {transform_indices = @transform_3, window_bounds = array<i64: 16, 128>}]} {
    %c0 = arith.constant 0 : index
    %c0_0 = arith.constant 0 : index
    %0 = vector.load %arg1[%c0, %c0_0] : memref<16x32xbf16, #tpu.memory_space<vmem>>, vector<16x32xbf16>
    %c0_1 = arith.constant 0 : index
    %c0_2 = arith.constant 0 : index
    %1 = vector.load %arg2[%c0_1, %c0_2] : memref<32x128xbf16, #tpu.memory_space<vmem>>, vector<32x128xbf16>
    %cst = arith.constant dense<0.000000e+00> : vector<16x128xf32>
    %2 = tpu.matmul %0, %1, %cst {dimension_numbers = #tpu.dot_dimension_numbers<[1], [0], [0], [1], [0, 0, 1, 1], [], []>} : vector<16x32xbf16>, vector<32x128xbf16>, vector<16x128xf32> -> vector<16x128xf32>
    %c0_3 = arith.constant 0 : index
    %c0_4 = arith.constant 0 : index
    %3 = vector.load %arg3[%c0_3, %c0_4] : memref<1x128xf32, #tpu.memory_space<vmem>>, vector<1x128xf32>
    %4 = vector.broadcast %3 : vector<1x128xf32> to vector<16x128xf32>
    %5 = arith.addf %2, %4 : vector<16x128xf32>
    %cst_5 = arith.constant dense<0xFF800000> : vector<16xf32>
    %6 = vector.multi_reduction <maximumf>, %5, %cst_5 [1] : vector<16x128xf32> to vector<16xf32>
    %7 = vector.shape_cast %6 : vector<16xf32> to vector<16x1xf32>
    %8 = vector.broadcast %7 : vector<16x1xf32> to vector<16x128xf32>
    %9 = arith.subf %5, %8 : vector<16x128xf32>
    %10 = math.exp %9 : vector<16x128xf32>
    %cst_6 = arith.constant dense<0.000000e+00> : vector<16xf32>
    %11 = vector.multi_reduction <add>, %10, %cst_6 [1] : vector<16x128xf32> to vector<16xf32>
    %12 = vector.shape_cast %11 : vector<16xf32> to vector<16x1xf32>
    %13 = tpu.reciprocal %12 {approx = true} : vector<16x1xf32> -> vector<16x1xf32>
    %14 = arith.mulf %12, %13 : vector<16x1xf32>
    %cst_7 = arith.constant 2.000000e+00 : f32
    %15 = vector.broadcast %cst_7 : f32 to vector<16x1xf32>
    %16 = arith.subf %15, %14 : vector<16x1xf32>
    %17 = arith.mulf %13, %16 : vector<16x1xf32>
    %18 = vector.broadcast %17 : vector<16x1xf32> to vector<16x128xf32>
    %19 = arith.mulf %10, %18 : vector<16x128xf32>
    %c0_8 = arith.constant 0 : index
    %c0_9 = arith.constant 0 : index
    %20 = vector.load %arg4[%c0_8, %c0_9] : memref<16x128xf32, #tpu.memory_space<vmem>>, vector<16x128xf32>
    tpu.vector_store %arg4[%c0_8, %c0_9], %19 {strides = array<i32>} : memref<16x128xf32, #tpu.memory_space<vmem>>, vector<16x128xf32>,
    return
  }
  func.func @transform_0(%arg0: i32) -> (i32, i32) {
    %c0_i32 = arith.constant 0 : i32
    %c0_i32_0 = arith.constant 0 : i32
    return %arg0, %c0_i32 : i32, i32
  }
  func.func @transform_1(%arg0: i32) -> (i32, i32) {
    %c0_i32 = arith.constant 0 : i32
    %c0_i32_0 = arith.constant 0 : i32
    %c0_i32_1 = arith.constant 0 : i32
    return %c0_i32, %c0_i32_0 : i32, i32
  }
  func.func @transform_2(%arg0: i32) -> (i32, i32) {
    %c0_i32 = arith.constant 0 : i32
    %c0_i32_0 = arith.constant 0 : i32
    %c0_i32_1 = arith.constant 0 : i32
    return %c0_i32, %c0_i32_0 : i32, i32
  }
  func.func @transform_3(%arg0: i32) -> (i32, i32) {
    %c0_i32 = arith.constant 0 : i32
    %c0_i32_0 = arith.constant 0 : i32
    return %arg0, %c0_i32 : i32, i32
  }
}

module attributes {stable_mosaic.version = 11 : i64} {
  func.func @_wrapper_kernel(%arg0: i32, %arg1: memref<16x32xbf16, #tpu.memory_space<vmem>>, %arg2: memref<32x128xbf16, #tpu.memory_space<vmem>>, %arg3: memref<1x128xf32, #tpu.memory_space<vmem>>, %arg4: memref<16x128xf32, #tpu.memory_space<vmem>>) attributes {dimension_semantics = [#tpu.dimension_semantics<parallel>], iteration_bounds = array<i64: 1>, scalar_prefetch = 0 : i64, scratch_operands = 0 : i64, tpu.core_type = #tpu.core_type<tc>, window_params = [{transform_indices = @transform_0, window_bounds = array<i64: 16, 32>}, {pipeline_mode = #tpu.pipeline_mode<synchronous>, transform_indices = @transform_1, window_bounds = array<i64: 32, 128>}, {pipeline_mode = #tpu.pipeline_mode<synchronous>, transform_indices = @transform_2, window_bounds = array<i64: 1, 128>}, {transform_indices = @transform_3, window_bounds = array<i64: 16, 128>}]} {
    %c0 = arith.constant 0 : index
    %c0_0 = arith.constant 0 : index
    %0 = vector.load %arg1[%c0, %c0_0] : memref<16x32xbf16, #tpu.memory_space<vmem>>, vector<16x32xbf16>
    %c0_1 = arith.constant 0 : index
    %c0_2 = arith.constant 0 : index
    %1 = vector.load %arg2[%c0_1, %c0_2] : memref<32x128xbf16, #tpu.memory_space<vmem>>, vector<32x128xbf16>
    %cst = arith.constant dense<0.000000e+00> : vector<16x128xf32>
    %2 = tpu.matmul %0, %1, %cst {dimension_numbers = #tpu.dot_dimension_numbers<[1], [0], [0], [1], [0, 0, 1, 1], [], []>} : vector<16x32xbf16>, vector<32x128xbf16>, vector<16x128xf32> -> vector<16x128xf32>
    %c0_3 = arith.constant 0 : index
    %c0_4 = arith.constant 0 : index
    %3 = vector.load %arg3[%c0_3, %c0_4] : memref<1x128xf32, #tpu.memory_space<vmem>>, vector<1x128xf32>
    %4 = vector.broadcast %3 : vector<1x128xf32> to vector<16x128xf32>
    %5 = arith.addf %2, %4 : vector<16x128xf32>
    %cst_5 = arith.constant dense<0xFF800000> : vector<16xf32>
    %6 = vector.multi_reduction <maximumf>, %5, %cst_5 [1] : vector<16x128xf32> to vector<16xf32>
    %7 = vector.shape_cast %6 : vector<16xf32> to vector<16x1xf32>
    %8 = vector.broadcast %7 : vector<16x1xf32> to vector<16x128xf32>
    %9 = arith.subf %5, %8 : vector<16x128xf32>
    %10 = math.exp %9 : vector<16x128xf32>
    %cst_6 = arith.constant dense<0.000000e+00> : vector<16xf32>
    %11 = vector.multi_reduction <add>, %10, %cst_6 [1] : vector<16x128xf32> to vector<16xf32>
    %12 = vector.shape_cast %11 : vector<16xf32> to vector<16x1xf32>
    %13 = tpu.reciprocal %12 {approx = true} : vector<16x1xf32> -> vector<16x1xf32>
    %14 = arith.mulf %12, %13 : vector<16x1xf32>
    %cst_7 = arith.constant 2.000000e+00 : f32
    %15 = vector.broadcast %cst_7 : f32 to vector<16x1xf32>
    %16 = arith.subf %15, %14 : vector<16x1xf32>
    %17 = arith.mulf %13, %16 : vector<16x1xf32>
    %18 = vector.broadcast %17 : vector<16x1xf32> to vector<16x128xf32>
    %19 = arith.mulf %10, %18 : vector<16x128xf32>
    %c0_8 = arith.constant 0 : index
    %c0_9 = arith.constant 0 : index
    %20 = vector.load %arg4[%c0_8, %c0_9] : memref<16x128xf32, #tpu.memory_space<vmem>>, vector<16x128xf32>
    tpu.vector_store %arg4[%c0_8, %c0_9], %19 {strides = array<i32>} : memref<16x128xf32, #tpu.memory_space<vmem>>, vector<16x128xf32>,
    return
  }
  func.func @transform_0(%arg0: i32) -> (i32, i32) {
    %c0_i32 = arith.constant 0 : i32
    %c0_i32_0 = arith.constant 0 : i32
    return %arg0, %c0_i32 : i32, i32
  }
  func.func @transform_1(%arg0: i32) -> (i32, i32) {
    %c0_i32 = arith.constant 0 : i32
    %c0_i32_0 = arith.constant 0 : i32
    %c0_i32_1 = arith.constant 0 : i32
    return %c0_i32, %c0_i32_0 : i32, i32
  }
  func.func @transform_2(%arg0: i32) -> (i32, i32) {
    %c0_i32 = arith.constant 0 : i32
    %c0_i32_0 = arith.constant 0 : i32
    %c0_i32_1 = arith.constant 0 : i32
    return %c0_i32, %c0_i32_0 : i32, i32
  }
  func.func @transform_3(%arg0: i32) -> (i32, i32) {
    %c0_i32 = arith.constant 0 : i32
    %c0_i32_0 = arith.constant 0 : i32
    return %arg0, %c0_i32 : i32, i32
  }
}

</mosaic_0001>

<llo_original>
// kernel: tpu_custom_call.1
$region0: #{tpu_custom_call.1}
  #allocation0 [shape = 'u32[]', space=smem, size = 0x4, offset = 0x4, fixed_abs, tag = 'smem constant byte address 0x4 - core index']
  #allocation1 [shape = 'u32[144,128]{1,0:T(1,128)}', space=vmem, size = 0x12000, scoped, tag = 'internal scratch']
  %s0 = inlined_call_operand.hbm [shape: bf16[16,32], index: 0, kind: input, shape index: {}]
  %s1 = inlined_call_operand.hbm [shape: bf16[32,128], index: 1, kind: input, shape index: {}]
  %s2 = inlined_call_operand.vmem [shape: f32[1,128], index: 2, kind: input, shape index: {}]
  %s3 = inlined_call_operand.hbm [shape: f32[16,128], index: 3, kind: output, shape index: {}]
  %s4 = sld [smem:[#allocation0]]
  $region30: #{tpu_custom_call.1} parent=0
    _
  %s6 = ssub.s32 1, %s4
  %s7 = scalar_select 0, %s6, %s4
  $region1: #{tpu_custom_call.1} parent=0
    #allocation2 [shape = 'u8[4096]{0}', space=vmem, size = 0x1000, scoped, tag = 'input window, operand 0, single buffered']
    #allocation3 [shape = 's32[1]{0}', space=sflag, size = 0x4, scoped, tag = 'scoped memory for tpu_custom_call.1']
    #allocation4 [shape = 's32[1]{0}', space=sflag, size = 0x4, scoped, tag = 'scoped memory for tpu_custom_call.1']
    #allocation5 [shape = 'u8[8192]{0}', space=vmem, size = 0x2000, scoped, tag = 'input window, operand 1, single buffered']
    #allocation6 [shape = 's32[1]{0}', space=sflag, size = 0x4, scoped, tag = 'scoped memory for tpu_custom_call.1']
    #allocation7 [shape = 'u8[8192]{0}', space=vmem, size = 0x2000, scoped, tag = 'output window, operand 0, single buffered']
    %8 = vsyncpa [#allocation3], 0
    %9 = vsyncpa [#allocation6], 0
    %10 = vsyncpa [#allocation4], 0
    // Predicated region
    $region2: #{tpu_custom_call.1} parent=1 // pred_check
      _
    $region3: #{tpu_custom_call.1} parent=1 // pred_check_branch
      %12 = sbr.rel (0) target = $region5
    $region4: #{tpu_custom_call.1} parent=1 // pred_region
      %s14 = ssub.s32 128, 128
      %15 = vsyncadd [#allocation3], %s14
      %s16 = sshll.u32 [#allocation2], 4
      %s17 = int_to_ptr.vmem [resolvable:$true] %s16
      %22 = dma.hbm_to_vmem [thread:$0]  %s0, 128, %s17, [#allocation3], 64, 64, 4
    $region5: #{tpu_custom_call.1} parent=1 // pred_fallthru
      _
    // Predicated region
    $region6: #{tpu_custom_call.1} parent=1 // pred_check
      _
    $region7: #{tpu_custom_call.1} parent=1 // pred_check_branch
      %24 = sbr.rel (0) target = $region9
    $region8: #{tpu_custom_call.1} parent=1 // pred_region
      %s26 = ssub.s32 256, 256
      %27 = vsyncadd [#allocation6], %s26
      %s28 = sshll.u32 [#allocation5], 4
      %s29 = int_to_ptr.vmem [resolvable:$true] %s28
      %34 = dma.hbm_to_vmem [thread:$0]  %s1, 256, %s29, [#allocation6], 64, 64, 4
    $region9: #{tpu_custom_call.1} parent=1 // pred_fallthru
      _
    // Predicated region
    $region10: #{tpu_custom_call.1} parent=1 // pred_check
      _
    $region11: #{tpu_custom_call.1} parent=1 // pred_check_branch
      %36 = sbr.rel (0) target = $region13
    $region12: #{tpu_custom_call.1} parent=1 // pred_region
      _
    $region13: #{tpu_custom_call.1} parent=1 // pred_fallthru
      _
    // Predicated region
    $region14: #{tpu_custom_call.1} parent=1 // pred_check
      _
    $region15: #{tpu_custom_call.1} parent=1 // pred_check_branch
      %38 = sbr.rel (0) target = $region17
    $region16: #{tpu_custom_call.1} parent=1 // pred_region
      %39 = dma.done [#allocation3], 128
    $region17: #{tpu_custom_call.1} parent=1 // pred_fallthru
      _
    // Predicated region
    $region18: #{tpu_custom_call.1} parent=1 // pred_check
      _
    $region19: #{tpu_custom_call.1} parent=1 // pred_check_branch
      %41 = sbr.rel (0) target = $region21
    $region20: #{tpu_custom_call.1} parent=1 // pred_region
      %42 = dma.done [#allocation6], 256
    $region21: #{tpu_custom_call.1} parent=1 // pred_fallthru
      _
    %v44 = vld [vmem:[#allocation2] sm:$0xf]
    %v45 = vld [vmem:[#allocation2 + $0x4] sm:$0xf]
    %v46 = vld [vmem:[#allocation5] sm:$0xf]
    %v47 = vld [vmem:[#allocation5 + $0x4] sm:$0xf]
    %v48 = vld [vmem:[#allocation5 + $0x8] sm:$0xf]
    %v49 = vld [vmem:[#allocation5 + $0xc] sm:$0xf]
    %v50 = vld [vmem:[%s2] sm:$0x1]
    %v52 = vlaneseq
    %v53 = vshrl.u32 %v52, 7
    %v54 = vsub.s32 0, %v53
    %v55 = vrot.slane %v50, %v54
    %v59 = vunpack.c.l.b16 %v44
    %v60 = vunpack.c.l.b16 %v45
    %v61 = vpack.c.b16 %v60, %v59
    %v66 = vunpack.c.l.b16 %v46
    %v67 = vunpack.c.l.b16 %v47
    %v68 = vunpack.c.l.b16 %v48
    %v69 = vunpack.c.l.b16 %v49
    %v70 = vpack.c.b16 %v67, %v66
    %v71 = vpack.c.b16 %v69, %v68
    %vm74 = vcmask 261120
    %v76 = vsel %vm74, %v61, 0
    %78 = vmatprep.subr.bf16.mxu0 0
    %79 = vmatpush1.bf16.msra.mxu0 %v70
    %80 = vmatprep.subr.bf16.mxu0 0
    %81 = vmatpush1.bf16.msra.mxu0 %v71
    %82 = vmatprep.subr.bf16.mxu0 0
    %83 = vmatpush1.bf16.msra.mxu0 0
    %84 = vmatprep.subr.bf16.mxu0 0
    %85 = vmatpush1.bf16.msra.mxu0 0
    %86 = vmatprep.subr.bf16.mxu0 0
    %87 = vmatpush1.bf16.msra.mxu0 0
    %88 = vmatprep.subr.bf16.mxu0 0
    %89 = vmatpush1.bf16.msra.mxu0 0
    %90 = vmatprep.subr.bf16.mxu0 0
    %91 = vmatpush1.bf16.msra.mxu0 0
    %92 = vmatprep.subr.bf16.mxu0 0
    %93 = vmatpush1.bf16.msra.mxu0 0
    %94 = vmatprep.subr.bf16.mxu0 0
    %95 = vmatpush1.bf16.msra.mxu0 0
    %96 = vmatprep.subr.bf16.mxu0 0
    %97 = vmatpush1.bf16.msra.mxu0 0
    %98 = vmatprep.subr.bf16.mxu0 0
    %99 = vmatpush1.bf16.msra.mxu0 0
    %100 = vmatprep.subr.bf16.mxu0 0
    %101 = vmatpush1.bf16.msra.mxu0 0
    %102 = vmatprep.subr.bf16.mxu0 0
    %103 = vmatpush1.bf16.msra.mxu0 0
    %104 = vmatprep.subr.bf16.mxu0 0
    %105 = vmatpush1.bf16.msra.mxu0 0
    %106 = vmatprep.subr.bf16.mxu0 0
    %107 = vmatpush1.bf16.msra.mxu0 0
    %108 = vmatprep.subr.bf16.mxu0 0
    %109 = vmatpush1.bf16.msra.mxu0 0
    %110 = vmatprep.mubr.bf16.mxu0 0
    %111 = vmatmul.mubr.bf16.gmra.mrb[0].mxu0 %v76
    %v112 = vpop.f32.mrb[0].mxu0
    %v113 = vadd.f32 %v55, %v112
    %v114 = vpop.f32.mrb[0].mxu0
    %v115 = vpop.f32.mrb[0].mxu0
    %v116 = vadd.f32 %v55, %v115
    %v117 = vpop.f32.mrb[0].mxu0
    %118 = vdwg.mxu0
    %119 = vmax.xlane.f32.xlu0 %v113
    %v120 = vpop.xlane.xlu0 %119
    %121 = vmax.xlane.f32.xlu0 %v116
    %v122 = vpop.xlane.xlu0 %121
    %v123 = vsub.f32 %v113, %v120
    %v124 = vsub.f32 %v116, %v122
    %v125 = vmul.f32 %v123, 1.442695
    %v126 = vpow.pop %v125
    %v127 = vmul.f32 %v124, 1.442695
    %v128 = vpow.pop %v127
    %129 = vadd.xlane.f32.xlu0 %v126
    %v130 = vpop.xlane.xlu0 %129
    %131 = vadd.xlane.f32.xlu0 %v128
    %v132 = vpop.xlane.xlu0 %131
    %v133 = vrcp.pop %v130
    %v134 = vrcp.pop %v132
    %v135 = vmul.f32 %v130, %v133
    %v136 = vmul.f32 %v132, %v134
    %v137 = vsub.f32 2.0, %v135
    %v138 = vsub.f32 2.0, %v136
    %v139 = vmul.f32 %v133, %v137
    %v140 = vmul.f32 %v134, %v138
    %v141 = vmul.f32 %v126, %v139
    %v142 = vmul.f32 %v128, %v140
    %143 = vst [vmem:[#allocation7] sm:$0xff] %v141
    %144 = vst [vmem:[#allocation7 + $0x8] sm:$0xff] %v142
    // Predicated region
    $region22: #{tpu_custom_call.1} parent=1 // pred_check
      _
    $region23: #{tpu_custom_call.1} parent=1 // pred_check_branch
      %146 = sbr.rel (0) target = $region25
    $region24: #{tpu_custom_call.1} parent=1 // pred_region
      %s148 = ssub.s32 256, 256
      %149 = vsyncadd [#allocation4], %s148
      %s150 = sshll.u32 [#allocation7], 4
      %s151 = int_to_ptr.vmem [resolvable:$true] %s150
      %156 = dma.vmem_to_hbm [thread:$0]  %s151, 256, %s3, [#allocation4], 128, 128, 8
    $region25: #{tpu_custom_call.1} parent=1 // pred_fallthru
      _
    // Predicated region
    $region26: #{tpu_custom_call.1} parent=1 // pred_check
      _
    $region27: #{tpu_custom_call.1} parent=1 // pred_check_branch
      %158 = sbr.rel (0) target = $region29
    $region28: #{tpu_custom_call.1} parent=1 // pred_region
      %159 = dma.done [#allocation4], 256
    $region29: #{tpu_custom_call.1} parent=1 // pred_fallthru
      _
    %160 = vsyncpa [#allocation3], 1
    %161 = vsyncpa [#allocation6], 1
    %162 = vsyncpa [#allocation4], 1

// kernel: tpu_custom_call.1
$region0: #{tpu_custom_call.1}
  #allocation0 [shape = 'u32[]', space=smem, size = 0x4, offset = 0x4, fixed_abs, tag = 'smem constant byte address 0x4 - core index']
  #allocation1 [shape = 'u32[144,128]{1,0:T(1,128)}', space=vmem, size = 0x12000, scoped, tag = 'internal scratch']
  %s0 = inlined_call_operand.hbm [shape: bf16[16,32], index: 0, kind: input, shape index: {}]
  %s1 = inlined_call_operand.hbm [shape: bf16[32,128], index: 1, kind: input, shape index: {}]
  %s2 = inlined_call_operand.vmem [shape: f32[1,128], index: 2, kind: input, shape index: {}]
  %s3 = inlined_call_operand.hbm [shape: f32[16,128], index: 3, kind: output, shape index: {}]
  %s4 = sld [smem:[#allocation0]]
  $region30: #{tpu_custom_call.1} parent=0
    _
  %s6 = ssub.s32 1, %s4
  %s7 = scalar_select 0, %s6, %s4
  $region1: #{tpu_custom_call.1} parent=0
    #allocation2 [shape = 'u8[4096]{0}', space=vmem, size = 0x1000, scoped, tag = 'input window, operand 0, single buffered']
    #allocation3 [shape = 's32[1]{0}', space=sflag, size = 0x4, scoped, tag = 'scoped memory for tpu_custom_call.1']
    #allocation4 [shape = 's32[1]{0}', space=sflag, size = 0x4, scoped, tag = 'scoped memory for tpu_custom_call.1']
    #allocation5 [shape = 'u8[8192]{0}', space=vmem, size = 0x2000, scoped, tag = 'input window, operand 1, single buffered']
    #allocation6 [shape = 's32[1]{0}', space=sflag, size = 0x4, scoped, tag = 'scoped memory for tpu_custom_call.1']
    #allocation7 [shape = 'u8[8192]{0}', space=vmem, size = 0x2000, scoped, tag = 'output window, operand 0, single buffered']
    %8 = vsyncpa [#allocation3], 0
    %9 = vsyncpa [#allocation6], 0
    %10 = vsyncpa [#allocation4], 0
    // Predicated region
    $region2: #{tpu_custom_call.1} parent=1 // pred_check
      _
    $region3: #{tpu_custom_call.1} parent=1 // pred_check_branch
      %12 = sbr.rel (0) target = $region5
    $region4: #{tpu_custom_call.1} parent=1 // pred_region
      %s14 = ssub.s32 128, 128
      %15 = vsyncadd [#allocation3], %s14
      %s16 = sshll.u32 [#allocation2], 4
      %s17 = int_to_ptr.vmem [resolvable:$true] %s16
      %22 = dma.hbm_to_vmem [thread:$0]  %s0, 128, %s17, [#allocation3], 64, 64, 4
    $region5: #{tpu_custom_call.1} parent=1 // pred_fallthru
      _
    // Predicated region
    $region6: #{tpu_custom_call.1} parent=1 // pred_check
      _
    $region7: #{tpu_custom_call.1} parent=1 // pred_check_branch
      %24 = sbr.rel (0) target = $region9
    $region8: #{tpu_custom_call.1} parent=1 // pred_region
      %s26 = ssub.s32 256, 256
      %27 = vsyncadd [#allocation6], %s26
      %s28 = sshll.u32 [#allocation5], 4
      %s29 = int_to_ptr.vmem [resolvable:$true] %s28
      %34 = dma.hbm_to_vmem [thread:$0]  %s1, 256, %s29, [#allocation6], 64, 64, 4
    $region9: #{tpu_custom_call.1} parent=1 // pred_fallthru
      _
    // Predicated region
    $region10: #{tpu_custom_call.1} parent=1 // pred_check
      _
    $region11: #{tpu_custom_call.1} parent=1 // pred_check_branch
      %36 = sbr.rel (0) target = $region13
    $region12: #{tpu_custom_call.1} parent=1 // pred_region
      _
    $region13: #{tpu_custom_call.1} parent=1 // pred_fallthru
      _
    // Predicated region
    $region14: #{tpu_custom_call.1} parent=1 // pred_check
      _
    $region15: #{tpu_custom_call.1} parent=1 // pred_check_branch
      %38 = sbr.rel (0) target = $region17
    $region16: #{tpu_custom_call.1} parent=1 // pred_region
      %39 = dma.done [#allocation3], 128
    $region17: #{tpu_custom_call.1} parent=1 // pred_fallthru
      _
    // Predicated region
    $region18: #{tpu_custom_call.1} parent=1 // pred_check
      _
    $region19: #{tpu_custom_call.1} parent=1 // pred_check_branch
      %41 = sbr.rel (0) target = $region21
    $region20: #{tpu_custom_call.1} parent=1 // pred_region
      %42 = dma.done [#allocation6], 256
    $region21: #{tpu_custom_call.1} parent=1 // pred_fallthru
      _
    %v44 = vld [vmem:[#allocation2] sm:$0xf]
    %v45 = vld [vmem:[#allocation2 + $0x4] sm:$0xf]
    %v46 = vld [vmem:[#allocation5] sm:$0xf]
    %v47 = vld [vmem:[#allocation5 + $0x4] sm:$0xf]
    %v48 = vld [vmem:[#allocation5 + $0x8] sm:$0xf]
    %v49 = vld [vmem:[#allocation5 + $0xc] sm:$0xf]
    %v50 = vld [vmem:[%s2] sm:$0x1]
    %v52 = vlaneseq
    %v53 = vshrl.u32 %v52, 7
    %v54 = vsub.s32 0, %v53
    %v55 = vrot.slane %v50, %v54
    %v59 = vunpack.c.l.b16 %v44
    %v60 = vunpack.c.l.b16 %v45
    %v61 = vpack.c.b16 %v60, %v59
    %v66 = vunpack.c.l.b16 %v46
    %v67 = vunpack.c.l.b16 %v47
    %v68 = vunpack.c.l.b16 %v48
    %v69 = vunpack.c.l.b16 %v49
    %v70 = vpack.c.b16 %v67, %v66
    %v71 = vpack.c.b16 %v69, %v68
    %vm74 = vcmask 261120
    %v76 = vsel %vm74, %v61, 0
    %78 = vmatprep.subr.bf16.mxu0 0
    %79 = vmatpush1.bf16.msra.mxu0 %v70
    %80 = vmatprep.subr.bf16.mxu0 0
    %81 = vmatpush1.bf16.msra.mxu0 %v71
    %82 = vmatprep.subr.bf16.mxu0 0
    %83 = vmatpush1.bf16.msra.mxu0 0
    %84 = vmatprep.subr.bf16.mxu0 0
    %85 = vmatpush1.bf16.msra.mxu0 0
    %86 = vmatprep.subr.bf16.mxu0 0
    %87 = vmatpush1.bf16.msra.mxu0 0
    %88 = vmatprep.subr.bf16.mxu0 0
    %89 = vmatpush1.bf16.msra.mxu0 0
    %90 = vmatprep.subr.bf16.mxu0 0
    %91 = vmatpush1.bf16.msra.mxu0 0
    %92 = vmatprep.subr.bf16.mxu0 0
    %93 = vmatpush1.bf16.msra.mxu0 0
    %94 = vmatprep.subr.bf16.mxu0 0
    %95 = vmatpush1.bf16.msra.mxu0 0
    %96 = vmatprep.subr.bf16.mxu0 0
    %97 = vmatpush1.bf16.msra.mxu0 0
    %98 = vmatprep.subr.bf16.mxu0 0
    %99 = vmatpush1.bf16.msra.mxu0 0
    %100 = vmatprep.subr.bf16.mxu0 0
    %101 = vmatpush1.bf16.msra.mxu0 0
    %102 = vmatprep.subr.bf16.mxu0 0
    %103 = vmatpush1.bf16.msra.mxu0 0
    %104 = vmatprep.subr.bf16.mxu0 0
    %105 = vmatpush1.bf16.msra.mxu0 0
    %106 = vmatprep.subr.bf16.mxu0 0
    %107 = vmatpush1.bf16.msra.mxu0 0
    %108 = vmatprep.subr.bf16.mxu0 0
    %109 = vmatpush1.bf16.msra.mxu0 0
    %110 = vmatprep.mubr.bf16.mxu0 0
    %111 = vmatmul.mubr.bf16.gmra.mrb[0].mxu0 %v76
    %v112 = vpop.f32.mrb[0].mxu0
    %v113 = vadd.f32 %v55, %v112
    %v114 = vpop.f32.mrb[0].mxu0
    %v115 = vpop.f32.mrb[0].mxu0
    %v116 = vadd.f32 %v55, %v115
    %v117 = vpop.f32.mrb[0].mxu0
    %118 = vdwg.mxu0
    %119 = vmax.xlane.f32.xlu0 %v113
    %v120 = vpop.xlane.xlu0 %119
    %121 = vmax.xlane.f32.xlu0 %v116
    %v122 = vpop.xlane.xlu0 %121
    %v123 = vsub.f32 %v113, %v120
    %v124 = vsub.f32 %v116, %v122
    %v125 = vmul.f32 %v123, 1.442695
    %v126 = vpow.pop %v125
    %v127 = vmul.f32 %v124, 1.442695
    %v128 = vpow.pop %v127
    %129 = vadd.xlane.f32.xlu0 %v126
    %v130 = vpop.xlane.xlu0 %129
    %131 = vadd.xlane.f32.xlu0 %v128
    %v132 = vpop.xlane.xlu0 %131
    %v133 = vrcp.pop %v130
    %v134 = vrcp.pop %v132
    %v135 = vmul.f32 %v130, %v133
    %v136 = vmul.f32 %v132, %v134
    %v137 = vsub.f32 2.0, %v135
    %v138 = vsub.f32 2.0, %v136
    %v139 = vmul.f32 %v133, %v137
    %v140 = vmul.f32 %v134, %v138
    %v141 = vmul.f32 %v126, %v139
    %v142 = vmul.f32 %v128, %v140
    %143 = vst [vmem:[#allocation7] sm:$0xff] %v141
    %144 = vst [vmem:[#allocation7 + $0x8] sm:$0xff] %v142
    // Predicated region
    $region22: #{tpu_custom_call.1} parent=1 // pred_check
      _
    $region23: #{tpu_custom_call.1} parent=1 // pred_check_branch
      %146 = sbr.rel (0) target = $region25
    $region24: #{tpu_custom_call.1} parent=1 // pred_region
      %s148 = ssub.s32 256, 256
      %149 = vsyncadd [#allocation4], %s148
      %s150 = sshll.u32 [#allocation7], 4
      %s151 = int_to_ptr.vmem [resolvable:$true] %s150
      %156 = dma.vmem_to_hbm [thread:$0]  %s151, 256, %s3, [#allocation4], 128, 128, 8
    $region25: #{tpu_custom_call.1} parent=1 // pred_fallthru
      _
    // Predicated region
    $region26: #{tpu_custom_call.1} parent=1 // pred_check
      _
    $region27: #{tpu_custom_call.1} parent=1 // pred_check_branch
      %158 = sbr.rel (0) target = $region29
    $region28: #{tpu_custom_call.1} parent=1 // pred_region
      %159 = dma.done [#allocation4], 256
    $region29: #{tpu_custom_call.1} parent=1 // pred_fallthru
      _
    %160 = vsyncpa [#allocation3], 1
    %161 = vsyncpa [#allocation6], 1
    %162 = vsyncpa [#allocation4], 1

</llo_original>
